<compile_context>
chip_gen: v5e
topology: v5e:2x2
jax: 0.10.0
libtpu: 0.0.40
codegen_flags: <defaults>
</compile_context>

<pallas_src>
import math

import jax
import jax.numpy as jnp
from jax.experimental import pallas as pl
from jax.experimental.pallas import tpu as pltpu


# ---------------------------------------------------------------------------
# Kernel body: pure lane-dense copy, with the dtype cast fused into the store.
# VPU slots are idle in a copy kernel, so the in-kernel cast is free and saves
# one full HBM pass per input compared with a pre-kernel astype.
# ---------------------------------------------------------------------------
def _cat_kernel(*refs):
    """refs = (*in_refs, out_ref).

    in_refs[i]: (tile_rows, W_i) VMEM tile of input i (its own dtype),
    out_ref   : (tile_rows, sum_i W_i) VMEM tile of the concatenated output.
    """
    in_refs = refs[:-1]
    o_ref = refs[-1]
    off = 0
    for r in in_refs:
        w = r.shape[-1]
        # TODO(synk): on v7x, non-128-multiple column offsets make these stores
        # masked (vst.msk) + XLU rotate; a 128-aligned placement fast path
        # would help there, but it is correct (and HBM-hidden on v5e/v6e).
        o_ref[:, off:off + w] = r[...].astype(o_ref.dtype)
        off += w


# ---------------------------------------------------------------------------
# Hardware / VMEM sizing helpers.
# ---------------------------------------------------------------------------
def _physical_vmem_bytes():
    try:
        info = pltpu.get_tpu_info()
        cap = int(getattr(info, "vmem_capacity_bytes", 0) or 0)
        if cap > 0:
            return cap
    except Exception:
        pass
    # Don't silently halve the budget on 128 MiB parts if the query fails.
    try:
        kind = jax.devices()[0].device_kind.lower()
        if any(k in kind for k in ("v4", "v5", "v6")):
            return 128 << 20
    except Exception:
        pass
    return 64 << 20  # conservative: v7x per-TensorCore VMEM


def _vmem_limit_bytes():
    # ~3/4 of physical: 96 MiB on v5e/v6e, 48 MiB on v7x.
    return _physical_vmem_bytes() * 3 // 4


def _plan_tile_rows(batch, per_row_db_bytes, per_row_bytes, sublane, vmem_limit):
    """Pick the row-tile size.

    per_row_db_bytes : double-buffered bytes per row = 2 * (inputs + output)
    per_row_bytes    : single-copy bytes per row     =     (inputs + output)
    Returns tile_rows, or None if even a single-sublane tile overflows VMEM
    (caller falls back to XLA concat; a column-tiled path would be needed).
    """
    budget = int(vmem_limit * 0.8)
    if per_row_db_bytes * sublane > budget:
        return None
    cap_rows = (budget // per_row_db_bytes) // sublane * sublane
    # Soft cap: ~16 MiB per (in+out) block already saturates HBM on every
    # generation; more (>=8) grid steps give better DMA overlap (esp. v5e)
    # and megacore balance on v7x.
    soft_cap = ((16 << 20) // per_row_bytes) // sublane * sublane
    if soft_cap >= sublane:
        cap_rows = min(cap_rows, soft_cap)
    if batch <= min(cap_rows, 4 * sublane):
        # Tiny batch: a single full-dim block (no sublane alignment needed,
        # nothing to pipeline anyway).
        return batch
    target_steps = 8
    tile_by_steps = (batch // target_steps) // sublane * sublane
    return min(cap_rows, max(sublane, tile_by_steps))


# ---------------------------------------------------------------------------
# Pallas concat on flattened (B, W_i) views.
# ---------------------------------------------------------------------------
def _cat_dim1_pallas(flats, widths, out_dtype, batch):
    w_total = sum(widths)
    out_itemsize = jnp.dtype(out_dtype).itemsize
    in_itemsizes = [jnp.dtype(f.dtype).itemsize for f in flats]

    # Sublane packing for the second-to-last dim: 8 for 4-byte, 16 for 2-byte,
    # 32 for 1-byte dtypes; take the strictest across all operands.
    sublane = max(max(8, 32 // isz) for isz in in_itemsizes + [out_itemsize])

    in_bytes_per_row = sum(w * isz for w, isz in zip(widths, in_itemsizes))
    out_bytes_per_row = w_total * out_itemsize
    per_row = in_bytes_per_row + out_bytes_per_row
    per_row_db = 2 * per_row  # BlockSpec double-buffers every operand

    vmem_limit = _vmem_limit_bytes()
    tile_rows = _plan_tile_rows(batch, per_row_db, per_row, sublane, vmem_limit)
    if tile_rows is None:
        return None

    # Ragged last block: reads past `batch` are unspecified but the matching
    # writes are clipped — safe for a pure copy.  No jnp.pad / post-slice pass.
    grid = (pl.cdiv(batch, tile_rows),)

    in_specs = [pl.BlockSpec((tile_rows, w), lambda i: (i, 0)) for w in widths]
    out_spec = pl.BlockSpec((tile_rows, w_total), lambda i: (i, 0))

    return pl.pallas_call(
        _cat_kernel,
        out_shape=jax.ShapeDtypeStruct((batch, w_total), out_dtype),
        grid_spec=pltpu.PrefetchScalarGridSpec(
            num_scalar_prefetch=0,
            grid=grid,
            in_specs=in_specs,
            out_specs=out_spec,
        ),
        compiler_params=pltpu.CompilerParams(
            dimension_semantics=("parallel",),   # v7x: shard rows over 2 TCs
            vmem_limit_bytes=vmem_limit,         # v5e default is only 16 MiB
        ),
        cost_estimate=pl.CostEstimate(
            flops=0, transcendentals=0, bytes_accessed=batch * per_row),
    )(*flats)


# ---------------------------------------------------------------------------
# Public API.
# ---------------------------------------------------------------------------
def cat_dim1(tensors, use_pallas=None):
    """torch.cat(tensors, dim=1).  use_pallas: None = heuristic, True/False = force."""
    tensors = list(tensors)
    assert len(tensors) >= 1
    nd = tensors[0].ndim
    assert nd >= 2, "cat along dim=1 requires ndim >= 2"

    out_dtype = jnp.result_type(*[t.dtype for t in tensors])
    batch = int(tensors[0].shape[0])
    rest = tuple(int(d) for d in tensors[0].shape[2:])
    for t in tensors:
        assert (t.ndim == nd and int(t.shape[0]) == batch
                and tuple(int(d) for d in t.shape[2:]) == rest), (
            "all tensors must match in every dim except dim=1")

    if len(tensors) == 1:
        return tensors[0].astype(out_dtype)

    rest_sz = int(math.prod(rest)) if rest else 1
    widths = [int(t.shape[1]) * rest_sz for t in tensors]
    w_total = sum(widths)
    cat_channels = sum(int(t.shape[1]) for t in tensors)

    # Row-major flatten: cat along dim=1 of (B, C_i, *rest) is exactly cat
    # along the last axis of the flattened (B, C_i * R) views (lane-dense out).
    flats = [t.reshape(batch, w) for t, w in zip(tensors, widths)]

    if use_pallas is None:
        # Small problems: XLA concat fuses with the producers and skips a
        # materialization; Pallas launch overhead dominates there anyway.
        out_bytes = batch * w_total * jnp.dtype(out_dtype).itemsize
        use_pallas = out_bytes >= (1 << 20)

    out = None
    if use_pallas:
        out = _cat_dim1_pallas(flats, widths, out_dtype, batch)
    if out is None:
        # TODO(synk): column-tiled Pallas path for rows wider than a single
        # sublane VMEM tile (relevant on v7x's 48 MiB budget); XLA concat here.
        out = jnp.concatenate([f.astype(out_dtype) for f in flats], axis=1)

    return out.reshape((batch, cat_channels) + rest)


def cat_out(module_fn, x, use_pallas=None):
    """CatOut.forward: torch.cat(self.module(x), dim=1).

    TODO(synk): the wrapped self.module is an arbitrary PyTorch module with no
    generic Pallas equivalent; it is supplied here as a plain JAX callable and
    only the dim=1 concatenation (+ fused dtype cast) runs inside the kernel.
    """
    outs = module_fn(x)
    if not isinstance(outs, (list, tuple)):
        outs = (outs,)
    return cat_dim1(list(outs), use_pallas=use_pallas)


if __name__ == "__main__":
    key = jax.random.PRNGKey(0)

    # Test 1: CatOut forward — f32 activations (batch, channels, H, W); the
    # wrapped module returns three tensors (2, 2, 4 channels), one of them
    # bf16 to exercise the fused in-kernel cast.
    batch, channels, h, w = 2, 4, 16, 16
    x = jax.random.normal(key, (batch, channels, h, w), dtype=jnp.float32)

    def module_fn(x):
        a, b = jnp.split(x, 2, axis=1)
        return (a * 2.0 + 1.0, (b - 3.0).astype(jnp.bfloat16), jnp.tanh(x))

    out = cat_out(module_fn, x, use_pallas=True)
    jax.block_until_ready(out)
    ref = jnp.concatenate([o.astype(jnp.float32) for o in module_fn(x)], axis=1)
    assert out.shape == (batch, 8, h, w)
    assert out.dtype == jnp.float32
    assert jnp.allclose(out, ref), "mismatch (CatOut, mixed-dtype outputs)"

    # Test 2: bf16, odd batch, heterogeneous channel counts (single full-dim
    # row block path).
    key2 = jax.random.PRNGKey(0)
    xa = jax.random.normal(key2, (3, 3, 8, 8), dtype=jnp.bfloat16)
    xb = jax.random.normal(key2, (3, 5, 8, 8), dtype=jnp.bfloat16)
    out2 = cat_dim1([xa, xb], use_pallas=True)
    jax.block_until_ready(out2)
    ref2 = jnp.concatenate([xa, xb], axis=1)
    assert out2.shape == (3, 8, 8, 8)
    assert out2.dtype == jnp.bfloat16
    assert jnp.array_equal(out2, ref2), "mismatch (bf16, odd batch)"

    # Test 3: ragged cdiv grid (batch=100, tile_rows=8 -> 13 steps, last block
    # only partially valid) — exercises the no-pad / clipped-write path.
    key3 = jax.random.PRNGKey(0)
    ya = jax.random.normal(key3, (100, 3, 8, 8), dtype=jnp.float32)
    yb = jax.random.normal(key3, (100, 5, 8, 8), dtype=jnp.float32)
    out3 = cat_dim1([ya, yb], use_pallas=True)
    jax.block_until_ready(out3)
    ref3 = jnp.concatenate([ya, yb], axis=1)
    assert out3.shape == (100, 8, 8, 8)
    assert jnp.array_equal(out3, ref3), "mismatch (f32, ragged last block)"

    print("KERNEL_OK")
</pallas_src>

<mosaic_0001>
module attributes {stable_mosaic.version = 11 : i64} {
  func.func @_cat_kernel(%arg0: i32, %arg1: memref<2x512xf32, #tpu.memory_space<vmem>>, %arg2: memref<2x512xbf16, #tpu.memory_space<vmem>>, %arg3: memref<2x1024xf32, #tpu.memory_space<vmem>>, %arg4: memref<2x2048xf32, #tpu.memory_space<vmem>>) attributes {dimension_semantics = [#tpu.dimension_semantics<parallel>], iteration_bounds = array<i64: 1>, scalar_prefetch = 0 : i64, scratch_operands = 0 : i64, tpu.core_type = #tpu.core_type<tc>, window_params = [{transform_indices = @transform_0, window_bounds = array<i64: 2, 512>}, {transform_indices = @transform_1, window_bounds = array<i64: 2, 512>}, {transform_indices = @transform_2, window_bounds = array<i64: 2, 1024>}, {transform_indices = @transform_3, window_bounds = array<i64: 2, 2048>}]} {
    %c0 = arith.constant 0 : index
    %c0_0 = arith.constant 0 : index
    %0 = vector.load %arg1[%c0, %c0_0] : memref<2x512xf32, #tpu.memory_space<vmem>>, vector<2x512xf32>
    %c0_1 = arith.constant 0 : index
    %c0_2 = arith.constant 0 : index
    %1 = vector.load %arg4[%c0_1, %c0_2] : memref<2x2048xf32, #tpu.memory_space<vmem>>, vector<2x512xf32>
    tpu.vector_store %arg4[%c0_1, %c0_2], %0 {strides = array<i32>} : memref<2x2048xf32, #tpu.memory_space<vmem>>, vector<2x512xf32>,
    %c0_3 = arith.constant 0 : index
    %c0_4 = arith.constant 0 : index
    %2 = vector.load %arg2[%c0_3, %c0_4] : memref<2x512xbf16, #tpu.memory_space<vmem>>, vector<2x512xbf16>
    %3 = arith.extf %2 : vector<2x512xbf16> to vector<2x512xf32>
    %c0_5 = arith.constant 0 : index
    %c512 = arith.constant 512 : index
    %4 = vector.load %arg4[%c0_5, %c512] : memref<2x2048xf32, #tpu.memory_space<vmem>>, vector<2x512xf32>
    tpu.vector_store %arg4[%c0_5, %c512], %3 {strides = array<i32>} : memref<2x2048xf32, #tpu.memory_space<vmem>>, vector<2x512xf32>,
    %c0_6 = arith.constant 0 : index
    %c0_7 = arith.constant 0 : index
    %5 = vector.load %arg3[%c0_6, %c0_7] : memref<2x1024xf32, #tpu.memory_space<vmem>>, vector<2x1024xf32>
    %c0_8 = arith.constant 0 : index
    %c1024 = arith.constant 1024 : index
    %6 = vector.load %arg4[%c0_8, %c1024] : memref<2x2048xf32, #tpu.memory_space<vmem>>, vector<2x1024xf32>
    tpu.vector_store %arg4[%c0_8, %c1024], %5 {strides = array<i32>} : memref<2x2048xf32, #tpu.memory_space<vmem>>, vector<2x1024xf32>,
    return
  }
  func.func @transform_0(%arg0: i32) -> (i32, i32) {
    %c0_i32 = arith.constant 0 : i32
    %c0_i32_0 = arith.constant 0 : i32
    return %arg0, %c0_i32 : i32, i32
  }
  func.func @transform_1(%arg0: i32) -> (i32, i32) {
    %c0_i32 = arith.constant 0 : i32
    %c0_i32_0 = arith.constant 0 : i32
    return %arg0, %c0_i32 : i32, i32
  }
  func.func @transform_2(%arg0: i32) -> (i32, i32) {
    %c0_i32 = arith.constant 0 : i32
    %c0_i32_0 = arith.constant 0 : i32
    return %arg0, %c0_i32 : i32, i32
  }
  func.func @transform_3(%arg0: i32) -> (i32, i32) {
    %c0_i32 = arith.constant 0 : i32
    %c0_i32_0 = arith.constant 0 : i32
    return %arg0, %c0_i32 : i32, i32
  }
}

</mosaic_0001>

<llo_original>
// kernel: tpu_custom_call.1
$region0: #{tpu_custom_call.1}
  #allocation0 [shape = 'u32[]', space=smem, size = 0x4, offset = 0x4, fixed_abs, tag = 'smem constant byte address 0x4 - core index']
  #allocation1 [shape = 'u32[72,128]{1,0:T(1,128)}', space=vmem, size = 0x9000, scoped, tag = 'internal scratch']
  %s0 = inlined_call_operand.hbm [shape: f32[2,512], index: 0, kind: input, shape index: {}]
  %s1 = inlined_call_operand.hbm [shape: bf16[2,512], index: 1, kind: input, shape index: {}]
  %s2 = inlined_call_operand.hbm [shape: f32[2,1024], index: 2, kind: input, shape index: {}]
  %s3 = inlined_call_operand.hbm [shape: f32[2,2048], index: 3, kind: output, shape index: {}]
  %s4 = sld [smem:[#allocation0]]
  $region34: #{tpu_custom_call.1} parent=0
    _
  %s6 = ssub.s32 1, %s4
  %s7 = scalar_select 0, %s6, %s4
  $region1: #{tpu_custom_call.1} parent=0
    #allocation2 [shape = 'u8[4096]{0}', space=vmem, size = 0x1000, scoped, tag = 'input window, operand 0, single buffered']
    #allocation3 [shape = 's32[1]{0}', space=sflag, size = 0x4, scoped, tag = 'scoped memory for tpu_custom_call.1']
    #allocation4 [shape = 's32[1]{0}', space=sflag, size = 0x4, scoped, tag = 'scoped memory for tpu_custom_call.1']
    #allocation5 [shape = 'u8[2048]{0}', space=vmem, size = 0x800, scoped, tag = 'input window, operand 1, single buffered']
    #allocation6 [shape = 's32[1]{0}', space=sflag, size = 0x4, scoped, tag = 'scoped memory for tpu_custom_call.1']
    #allocation7 [shape = 'u8[8192]{0}', space=vmem, size = 0x2000, scoped, tag = 'input window, operand 2, single buffered']
    #allocation8 [shape = 'u8[16384]{0}', space=vmem, size = 0x4000, scoped, tag = 'output window, operand 0, single buffered']
    %8 = vsyncpa [#allocation3], 0
    %9 = vsyncpa [#allocation6], 0
    %10 = vsyncpa [#allocation4], 0
    // Predicated region
    $region2: #{tpu_custom_call.1} parent=1 // pred_check
      _
    $region3: #{tpu_custom_call.1} parent=1 // pred_check_branch
      %12 = sbr.rel (0) target = $region5
    $region4: #{tpu_custom_call.1} parent=1 // pred_region
      %14 = vsyncadd [#allocation3], 0
      %s16 = sshll.u32 %s0, 4
      %s17 = int_to_ptr.hbm [resolvable:$true] %s16
      %s18 = sshll.u32 [#allocation2], 4
      %s19 = int_to_ptr.vmem [resolvable:$true] %s18
      %21 = dma.hbm_to_vmem [thread:$0]  %s17, 128, %s19, [#allocation3]
    $region5: #{tpu_custom_call.1} parent=1 // pred_fallthru
      _
    // Predicated region
    $region6: #{tpu_custom_call.1} parent=1 // pred_check
      _
    $region7: #{tpu_custom_call.1} parent=1 // pred_check_branch
      %23 = sbr.rel (0) target = $region9
    $region8: #{tpu_custom_call.1} parent=1 // pred_region
      %25 = vsyncadd [#allocation6], 0
      %s27 = sshll.u32 %s1, 4
      %s28 = int_to_ptr.hbm [resolvable:$true] %s27
      %s29 = sshll.u32 [#allocation5], 4
      %s30 = int_to_ptr.vmem [resolvable:$true] %s29
      %32 = dma.hbm_to_vmem [thread:$0]  %s28, 64, %s30, [#allocation6]
    $region9: #{tpu_custom_call.1} parent=1 // pred_fallthru
      _
    // Predicated region
    $region10: #{tpu_custom_call.1} parent=1 // pred_check
      _
    $region11: #{tpu_custom_call.1} parent=1 // pred_check_branch
      %34 = sbr.rel (0) target = $region13
    $region12: #{tpu_custom_call.1} parent=1 // pred_region
      %36 = vsyncadd [#allocation6], 0
      %s38 = sshll.u32 %s2, 4
      %s39 = int_to_ptr.hbm [resolvable:$true] %s38
      %s40 = sshll.u32 [#allocation7], 4
      %s41 = int_to_ptr.vmem [resolvable:$true] %s40
      %43 = dma.hbm_to_vmem [thread:$0]  %s39, 256, %s41, [#allocation6]
    $region13: #{tpu_custom_call.1} parent=1 // pred_fallthru
      _
    // Predicated region
    $region14: #{tpu_custom_call.1} parent=1 // pred_check
      _
    $region15: #{tpu_custom_call.1} parent=1 // pred_check_branch
      %45 = sbr.rel (0) target = $region17
    $region16: #{tpu_custom_call.1} parent=1 // pred_region
      %47 = dma.done [#allocation3], 128
    $region17: #{tpu_custom_call.1} parent=1 // pred_fallthru
      _
    // Predicated region
    $region18: #{tpu_custom_call.1} parent=1 // pred_check
      _
    $region19: #{tpu_custom_call.1} parent=1 // pred_check_branch
      %49 = sbr.rel (0) target = $region21
    $region20: #{tpu_custom_call.1} parent=1 // pred_region
      %51 = dma.done [#allocation6], 64
    $region21: #{tpu_custom_call.1} parent=1 // pred_fallthru
      _
    // Predicated region
    $region22: #{tpu_custom_call.1} parent=1 // pred_check
      _
    $region23: #{tpu_custom_call.1} parent=1 // pred_check_branch
      %53 = sbr.rel (0) target = $region25
    $region24: #{tpu_custom_call.1} parent=1 // pred_region
      %55 = dma.done [#allocation6], 256
    $region25: #{tpu_custom_call.1} parent=1 // pred_fallthru
      _
    %v56 = vld [vmem:[#allocation2] sm:$0xff]
    %57 = vst [vmem:[#allocation8] sm:$0xff] %v56
    %v58 = vld [vmem:[#allocation5] sm:$0xf]
    %v59 = vunpack.c.l.bf16 %v58
    %60 = vst [vmem:[#allocation8 + $0x8] sm:$0xff] %v59
    %v61 = vld [vmem:[#allocation7] sm:$0xff]
    %v62 = vld [vmem:[#allocation7 + $0x8] sm:$0xff]
    %63 = vst [vmem:[#allocation8 + $0x10] sm:$0xff] %v61
    %64 = vst [vmem:[#allocation8 + $0x18] sm:$0xff] %v62
    // Predicated region
    $region26: #{tpu_custom_call.1} parent=1 // pred_check
      _
    $region27: #{tpu_custom_call.1} parent=1 // pred_check_branch
      %66 = sbr.rel (0) target = $region29
    $region28: #{tpu_custom_call.1} parent=1 // pred_region
      %68 = vsyncadd [#allocation4], 0
      %s70 = sshll.u32 [#allocation8], 4
      %s71 = int_to_ptr.vmem [resolvable:$true] %s70
      %s72 = sshll.u32 %s3, 4
      %s73 = int_to_ptr.hbm [resolvable:$true] %s72
      %75 = dma.vmem_to_hbm [thread:$0]  %s71, 512, %s73, [#allocation4]
    $region29: #{tpu_custom_call.1} parent=1 // pred_fallthru
      _
    // Predicated region
    $region30: #{tpu_custom_call.1} parent=1 // pred_check
      _
    $region31: #{tpu_custom_call.1} parent=1 // pred_check_branch
      %77 = sbr.rel (0) target = $region33
    $region32: #{tpu_custom_call.1} parent=1 // pred_region
      %79 = dma.done [#allocation4], 512
    $region33: #{tpu_custom_call.1} parent=1 // pred_fallthru
      _
    %80 = vsyncpa [#allocation3], 1
    %81 = vsyncpa [#allocation6], 1
    %82 = vsyncpa [#allocation4], 1

</llo_original>
